<compile_context>
chip_gen: v5e
topology: v5e:2x2
jax: 0.10.0
libtpu: 0.0.40
codegen_flags: <defaults>
</compile_context>

<pallas_src>
import jax
import jax.numpy as jnp
from jax.experimental import pallas as pl
from jax.experimental.pallas import tpu as pltpu


IN_FEATURES = 23 * 23 + 1 + 3          # 533
H1, H2, OUT = 256, 128, 1
# 544 = round_up(533, 16).  Block last dim equals the full array dim, so the
# (8,128) rule is satisfied; Mosaic's in-VMEM lane layout still rounds to
# 5x128 internally, but HBM traffic for fc1 activations + w1 shrinks ~15%.
F_PAD = 544
OUT_PAD = 128                           # lane-dense final-layer width


def _round_up(x, m):
    return (x + m - 1) // m * m


def _choose_tm(batch):
    """Batch tile: big tiles for big batches, >=2 grid steps when B > 256."""
    if batch <= 256:
        return _round_up(batch, 16)            # bf16 sublane quantum
    # Guarantee at least two grid steps (v7x megacore) while keeping the tile
    # as large as possible (<= 1024) to amortize per-step overhead.
    half = _round_up((batch + 1) // 2, 256)
    return max(256, min(1024, half))


def mlp_kernel(x_ref, w1_ref, b1_ref, w2_ref, b2_ref, w3_ref, b3_ref, o_ref):
    # fc1: bf16 x bf16 on the MXU with f32 accumulation; bias+ReLU in f32 (VPU).
    h = jnp.dot(x_ref[...], w1_ref[...], preferred_element_type=jnp.float32)
    h = jnp.maximum(h + b1_ref[...], 0.0)
    # fc2
    h = jnp.dot(h.astype(jnp.bfloat16), w2_ref[...],
                preferred_element_type=jnp.float32)
    h = jnp.maximum(h + b2_ref[...], 0.0)
    # fc3 (+ bias folded in-kernel): lane-dense 128-wide tile, bf16 writeback
    # (only column 0 is real; wrapper slices it off).
    o = jnp.dot(h.astype(jnp.bfloat16), w3_ref[...],
                preferred_element_type=jnp.float32) + b3_ref[...]
    o_ref[...] = o.astype(o_ref.dtype)


def init_params(key):
    """Deterministic params mimicking nn.Linear default init, stored (in, out)."""
    def linear(key, fan_in, fan_out):
        kw, kb = jax.random.split(key)
        bound = 1.0 / jnp.sqrt(jnp.float32(fan_in))
        w = jax.random.uniform(kw, (fan_in, fan_out), jnp.float32, -bound, bound)
        b = jax.random.uniform(kb, (fan_out,), jnp.float32, -bound, bound)
        return w, b

    k1, k2, k3 = jax.random.split(key, 3)
    w1, b1 = linear(k1, IN_FEATURES, H1)     # fc1: 533 -> 256
    w2, b2 = linear(k2, H1, H2)              # fc2: 256 -> 128
    w3, b3 = linear(k3, H2, OUT)             # fc3: 128 -> 1
    return (w1, b1, w2, b2, w3, b3)


def prepare_params(params):
    """One-time padding / reshaping / bf16 cast, hoisted out of the wrapper."""
    w1, b1, w2, b2, w3, b3 = params
    w1_p = jnp.pad(w1, ((0, F_PAD - w1.shape[0]), (0, 0))).astype(jnp.bfloat16)
    w2_p = w2.astype(jnp.bfloat16)
    w3_p = jnp.pad(w3, ((0, 0), (0, OUT_PAD - w3.shape[1]))).astype(jnp.bfloat16)
    b1_2d = b1.reshape(1, -1).astype(jnp.float32)
    b2_2d = b2.reshape(1, -1).astype(jnp.float32)
    # fc3 scalar bias broadcast across the 128 padded output lanes (only lane 0
    # survives the wrapper slice), so the bias add happens in-kernel in f32.
    b3_2d = jnp.broadcast_to(b3.astype(jnp.float32).reshape(1, 1), (1, OUT_PAD))
    b3_2d = jnp.asarray(b3_2d)
    return (w1_p, b1_2d, w2_p, b2_2d, w3_p, b3_2d)


def _features_bf16(x, z, r, b_pad):
    """PyTorch semantics (view(B,-1), ascending sort, concat) -> padded bf16 slab.

    The zero column/row padding is built into the concatenate so XLA never
    materializes a separate f32 slab + pad/cast pass before the kernel.
    """
    # TODO(synk): torch.sort has no clean Pallas/Mosaic lowering; kept as
    # plain-JAX jnp.sort glue (likely the end-to-end hotspot at large B).
    B = x.shape[0]
    sx = jnp.sort(x.reshape(B, -1), axis=1).astype(jnp.bfloat16)   # (B, 529)
    sz = z.reshape(B, -1).astype(jnp.bfloat16)                     # (B, 1): sort of length-1 rows is the identity
    sr = jnp.sort(r.reshape(B, -1), axis=1).astype(jnp.bfloat16)   # (B, 3)
    feats = jnp.concatenate(
        [sx, sz, sr, jnp.zeros((B, F_PAD - IN_FEATURES), jnp.bfloat16)], axis=1)
    if b_pad > B:
        feats = jnp.concatenate(
            [feats, jnp.zeros((b_pad - B, F_PAD), jnp.bfloat16)], axis=0)
    return feats                                                    # (b_pad, F_PAD) bf16


@jax.jit
def simple_net_forward(x, z, r, prep):
    w1_p, b1_2d, w2_p, b2_2d, w3_p, b3_2d = prep
    B = x.shape[0]

    TM = _choose_tm(B)
    B_pad = _round_up(B, TM)
    feats_p = _features_bf16(x, z, r, B_pad)

    def resident(shape):
        # Grid-invariant index map -> parameter block stays in VMEM, DMA'd once.
        return pl.BlockSpec(shape, lambda i: (0, 0))

    out_full = pl.pallas_call(
        mlp_kernel,
        out_shape=jax.ShapeDtypeStruct((B_pad, OUT_PAD), jnp.bfloat16),
        grid=(B_pad // TM,),
        in_specs=[
            pl.BlockSpec((TM, F_PAD), lambda i: (i, 0)),    # activations (bf16)
            resident(w1_p.shape),                           # (544, 256) bf16
            resident(b1_2d.shape),                          # (1, 256)   f32
            resident(w2_p.shape),                           # (256, 128) bf16
            resident(b2_2d.shape),                          # (1, 128)   f32
            resident(w3_p.shape),                           # (128, 128) bf16
            resident(b3_2d.shape),                          # (1, 128)   f32
        ],
        out_specs=pl.BlockSpec((TM, OUT_PAD), lambda i: (i, 0)),
        compiler_params=pltpu.CompilerParams(
            dimension_semantics=("parallel",)),             # v7x: both TCs
    )(feats_p, w1_p, b1_2d, w2_p, b2_2d, w3_p, b3_2d)

    # Lane-dense bf16 kernel output: real result is column 0; return f32.
    return out_full[:B, :OUT].astype(jnp.float32)


def reference_forward_f32(x, z, r, params):
    """Pure-JAX f32 reference replicating the PyTorch forward semantics."""
    w1, b1, w2, b2, w3, b3 = params
    B = x.shape[0]
    feats = jnp.concatenate(
        [jnp.sort(x.reshape(B, -1), axis=1),
         z.reshape(B, -1),
         jnp.sort(r.reshape(B, -1), axis=1)], axis=1).astype(jnp.float32)
    h = jnp.maximum(feats @ w1 + b1, 0.0)
    h = jnp.maximum(h @ w2 + b2, 0.0)
    return h @ w3 + b3


def reference_forward_bf16(x, z, r, prep):
    """Plain-JAX reference with exactly the kernel's bf16/f32-acc numerics."""
    w1_p, b1_2d, w2_p, b2_2d, w3_p, b3_2d = prep
    B = x.shape[0]
    feats = _features_bf16(x, z, r, B)
    h = jnp.dot(feats, w1_p, preferred_element_type=jnp.float32)
    h = jnp.maximum(h + b1_2d, 0.0)
    h = jnp.dot(h.astype(jnp.bfloat16), w2_p, preferred_element_type=jnp.float32)
    h = jnp.maximum(h + b2_2d, 0.0)
    o = jnp.dot(h.astype(jnp.bfloat16), w3_p,
                preferred_element_type=jnp.float32) + b3_2d
    return o.astype(jnp.bfloat16)[:, :OUT].astype(jnp.float32)


if __name__ == "__main__":
    key = jax.random.PRNGKey(0)
    kp, kx, kz, kr = jax.random.split(key, 4)

    params = init_params(kp)
    prep = prepare_params(params)          # one-time weight prep (hoisted)

    B = 2
    x = jax.random.normal(kx, (B, 23, 23), jnp.float32)   # 23*23 = 529 features
    z = jax.random.normal(kz, (B, 1), jnp.float32)        # 1 feature
    r = jax.random.normal(kr, (B, 3), jnp.float32)        # 3 features

    out = jax.block_until_ready(simple_net_forward(x, z, r, prep))
    assert out.shape == (B, 1), out.shape

    # Matched-precision (bf16 weights/output, f32 accumulation) reference.
    ref_bf16 = jax.block_until_ready(reference_forward_bf16(x, z, r, prep))
    assert jnp.allclose(out, ref_bf16, atol=2e-3, rtol=2e-3), (out, ref_bf16)

    # Full-f32 reference: loose check (bf16 weights/output ~1e-2 abs error).
    ref_f32 = jax.block_until_ready(reference_forward_f32(x, z, r, params))
    assert jnp.allclose(out, ref_f32, atol=1e-1, rtol=1e-1), (out, ref_f32)

    print("KERNEL_OK")
</pallas_src>

<mosaic_0001>
module attributes {stable_mosaic.version = 11 : i64} {
  func.func @mlp_kernel(%arg0: i32, %arg1: memref<16x544xbf16, #tpu.memory_space<vmem>>, %arg2: memref<544x256xbf16, #tpu.memory_space<vmem>>, %arg3: memref<1x256xf32, #tpu.memory_space<vmem>>, %arg4: memref<256x128xbf16, #tpu.memory_space<vmem>>, %arg5: memref<1x128xf32, #tpu.memory_space<vmem>>, %arg6: memref<128x128xbf16, #tpu.memory_space<vmem>>, %arg7: memref<1x128xf32, #tpu.memory_space<vmem>>, %arg8: memref<16x128xbf16, #tpu.memory_space<vmem>>) attributes {dimension_semantics = [#tpu.dimension_semantics<parallel>], iteration_bounds = array<i64: 1>, scalar_prefetch = 0 : i64, scratch_operands = 0 : i64, tpu.core_type = #tpu.core_type<tc>, window_params = [{transform_indices = @transform_0, window_bounds = array<i64: 16, 544>}, {pipeline_mode = #tpu.pipeline_mode<synchronous>, transform_indices = @transform_1, window_bounds = array<i64: 544, 256>}, {pipeline_mode = #tpu.pipeline_mode<synchronous>, transform_indices = @transform_2, window_bounds = array<i64: 1, 256>}, {pipeline_mode = #tpu.pipeline_mode<synchronous>, transform_indices = @transform_3, window_bounds = array<i64: 256, 128>}, {pipeline_mode = #tpu.pipeline_mode<synchronous>, transform_indices = @transform_4, window_bounds = array<i64: 1, 128>}, {pipeline_mode = #tpu.pipeline_mode<synchronous>, transform_indices = @transform_5, window_bounds = array<i64: 128, 128>}, {pipeline_mode = #tpu.pipeline_mode<synchronous>, transform_indices = @transform_6, window_bounds = array<i64: 1, 128>}, {transform_indices = @transform_7, window_bounds = array<i64: 16, 128>}]} {
    %c0 = arith.constant 0 : index
    %c0_0 = arith.constant 0 : index
    %0 = vector.load %arg1[%c0, %c0_0] : memref<16x544xbf16, #tpu.memory_space<vmem>>, vector<16x544xbf16>
    %c0_1 = arith.constant 0 : index
    %c0_2 = arith.constant 0 : index
    %1 = vector.load %arg2[%c0_1, %c0_2] : memref<544x256xbf16, #tpu.memory_space<vmem>>, vector<544x256xbf16>
    %cst = arith.constant dense<0.000000e+00> : vector<16x256xf32>
    %2 = tpu.matmul %0, %1, %cst {dimension_numbers = #tpu.dot_dimension_numbers<[1], [0], [0], [1], [0, 0, 1, 1], [], []>} : vector<16x544xbf16>, vector<544x256xbf16>, vector<16x256xf32> -> vector<16x256xf32>
    %c0_3 = arith.constant 0 : index
    %c0_4 = arith.constant 0 : index
    %3 = vector.load %arg3[%c0_3, %c0_4] : memref<1x256xf32, #tpu.memory_space<vmem>>, vector<1x256xf32>
    %4 = vector.broadcast %3 : vector<1x256xf32> to vector<16x256xf32>
    %5 = arith.addf %2, %4 : vector<16x256xf32>
    %cst_5 = arith.constant 0.000000e+00 : f32
    %6 = vector.broadcast %cst_5 : f32 to vector<16x256xf32>
    %7 = arith.maximumf %5, %6 : vector<16x256xf32>
    %8 = arith.truncf %7 : vector<16x256xf32> to vector<16x256xbf16>
    %c0_6 = arith.constant 0 : index
    %c0_7 = arith.constant 0 : index
    %9 = vector.load %arg4[%c0_6, %c0_7] : memref<256x128xbf16, #tpu.memory_space<vmem>>, vector<256x128xbf16>
    %cst_8 = arith.constant dense<0.000000e+00> : vector<16x128xf32>
    %10 = tpu.matmul %8, %9, %cst_8 {dimension_numbers = #tpu.dot_dimension_numbers<[1], [0], [0], [1], [0, 0, 1, 1], [], []>} : vector<16x256xbf16>, vector<256x128xbf16>, vector<16x128xf32> -> vector<16x128xf32>
    %c0_9 = arith.constant 0 : index
    %c0_10 = arith.constant 0 : index
    %11 = vector.load %arg5[%c0_9, %c0_10] : memref<1x128xf32, #tpu.memory_space<vmem>>, vector<1x128xf32>
    %12 = vector.broadcast %11 : vector<1x128xf32> to vector<16x128xf32>
    %13 = arith.addf %10, %12 : vector<16x128xf32>
    %cst_11 = arith.constant 0.000000e+00 : f32
    %14 = vector.broadcast %cst_11 : f32 to vector<16x128xf32>
    %15 = arith.maximumf %13, %14 : vector<16x128xf32>
    %16 = arith.truncf %15 : vector<16x128xf32> to vector<16x128xbf16>
    %c0_12 = arith.constant 0 : index
    %c0_13 = arith.constant 0 : index
    %17 = vector.load %arg6[%c0_12, %c0_13] : memref<128x128xbf16, #tpu.memory_space<vmem>>, vector<128x128xbf16>
    %cst_14 = arith.constant dense<0.000000e+00> : vector<16x128xf32>
    %18 = tpu.matmul %16, %17, %cst_14 {dimension_numbers = #tpu.dot_dimension_numbers<[1], [0], [0], [1], [0, 0, 1, 1], [], []>} : vector<16x128xbf16>, vector<128x128xbf16>, vector<16x128xf32> -> vector<16x128xf32>
    %c0_15 = arith.constant 0 : index
    %c0_16 = arith.constant 0 : index
    %19 = vector.load %arg7[%c0_15, %c0_16] : memref<1x128xf32, #tpu.memory_space<vmem>>, vector<1x128xf32>
    %20 = vector.broadcast %19 : vector<1x128xf32> to vector<16x128xf32>
    %21 = arith.addf %18, %20 : vector<16x128xf32>
    %22 = arith.truncf %21 : vector<16x128xf32> to vector<16x128xbf16>
    %c0_17 = arith.constant 0 : index
    %c0_18 = arith.constant 0 : index
    %23 = vector.load %arg8[%c0_17, %c0_18] : memref<16x128xbf16, #tpu.memory_space<vmem>>, vector<16x128xbf16>
    tpu.vector_store %arg8[%c0_17, %c0_18], %22 {strides = array<i32>} : memref<16x128xbf16, #tpu.memory_space<vmem>>, vector<16x128xbf16>,
    return
  }
  func.func @transform_0(%arg0: i32) -> (i32, i32) {
    %c0_i32 = arith.constant 0 : i32
    %c0_i32_0 = arith.constant 0 : i32
    return %arg0, %c0_i32 : i32, i32
  }
  func.func @transform_1(%arg0: i32) -> (i32, i32) {
    %c0_i32 = arith.constant 0 : i32
    %c0_i32_0 = arith.constant 0 : i32
    %c0_i32_1 = arith.constant 0 : i32
    return %c0_i32, %c0_i32_0 : i32, i32
  }
  func.func @transform_2(%arg0: i32) -> (i32, i32) {
    %c0_i32 = arith.constant 0 : i32
    %c0_i32_0 = arith.constant 0 : i32
    %c0_i32_1 = arith.constant 0 : i32
    return %c0_i32, %c0_i32_0 : i32, i32
  }
  func.func @transform_3(%arg0: i32) -> (i32, i32) {
    %c0_i32 = arith.constant 0 : i32
    %c0_i32_0 = arith.constant 0 : i32
    %c0_i32_1 = arith.constant 0 : i32
    return %c0_i32, %c0_i32_0 : i32, i32
  }
  func.func @transform_4(%arg0: i32) -> (i32, i32) {
    %c0_i32 = arith.constant 0 : i32
    %c0_i32_0 = arith.constant 0 : i32
    %c0_i32_1 = arith.constant 0 : i32
    return %c0_i32, %c0_i32_0 : i32, i32
  }
  func.func @transform_5(%arg0: i32) -> (i32, i32) {
    %c0_i32 = arith.constant 0 : i32
    %c0_i32_0 = arith.constant 0 : i32
    %c0_i32_1 = arith.constant 0 : i32
    return %c0_i32, %c0_i32_0 : i32, i32
  }
  func.func @transform_6(%arg0: i32) -> (i32, i32) {
    %c0_i32 = arith.constant 0 : i32
    %c0_i32_0 = arith.constant 0 : i32
    %c0_i32_1 = arith.constant 0 : i32
    return %c0_i32, %c0_i32_0 : i32, i32
  }
  func.func @transform_7(%arg0: i32) -> (i32, i32) {
    %c0_i32 = arith.constant 0 : i32
    %c0_i32_0 = arith.constant 0 : i32
    return %arg0, %c0_i32 : i32, i32
  }
}

</mosaic_0001>

<llo_original>
// kernel: simple_net_forward.1
$region0: #{simple_net_forward.1}
  #allocation0 [shape = 'u32[]', space=smem, size = 0x4, offset = 0x4, fixed_abs, tag = 'smem constant byte address 0x4 - core index']
  #allocation1 [shape = 'u32[72,128]{1,0:T(1,128)}', space=vmem, size = 0x9000, scoped, tag = 'internal scratch']
  %s0 = inlined_call_operand.vmem [shape: bf16[16,544], index: 0, kind: input, shape index: {}]
  %s1 = inlined_call_operand.hbm [shape: bf16[544,256], index: 1, kind: input, shape index: {}]
  %s2 = inlined_call_operand.vmem [shape: f32[1,256], index: 2, kind: input, shape index: {}]
  %s3 = inlined_call_operand.vmem [shape: bf16[256,128], index: 3, kind: input, shape index: {}]
  %s4 = inlined_call_operand.vmem [shape: f32[1,128], index: 4, kind: input, shape index: {}]
  %s5 = inlined_call_operand.vmem [shape: bf16[128,128], index: 5, kind: input, shape index: {}]
  %s6 = inlined_call_operand.vmem [shape: f32[1,128], index: 6, kind: input, shape index: {}]
  %s7 = inlined_call_operand.vmem [shape: bf16[16,128], index: 7, kind: output, shape index: {}]
  %s8 = sld [smem:[#allocation0]]
  $region42: #{simple_net_forward.1} parent=0
    _
  %s10 = ssub.s32 1, %s8
  %s11 = scalar_select 0, %s10, %s8
  $region1: #{simple_net_forward.1} parent=0
    #allocation2 [shape = 'u8[278528]{0}', space=vmem, size = 0x44000, scoped, tag = 'input window, operand 1, single buffered']
    #allocation3 [shape = 's32[1]{0}', space=sflag, size = 0x4, scoped, tag = 'scoped memory for simple_net_forward.1']
    %12 = vsyncpa [#allocation3], 0
    // Predicated region
    $region2: #{simple_net_forward.1} parent=1 // pred_check
      _
    $region3: #{simple_net_forward.1} parent=1 // pred_check_branch
      %14 = sbr.rel (0) target = $region5
    $region4: #{simple_net_forward.1} parent=1 // pred_region
      _
    $region5: #{simple_net_forward.1} parent=1 // pred_fallthru
      _
    // Predicated region
    $region6: #{simple_net_forward.1} parent=1 // pred_check
      _
    $region7: #{simple_net_forward.1} parent=1 // pred_check_branch
      %16 = sbr.rel (0) target = $region9
    $region8: #{simple_net_forward.1} parent=1 // pred_region
      %18 = vsyncadd [#allocation3], 0
      %s19 = sshll.u32 %s1, 4
      %s20 = int_to_ptr.hbm [resolvable:$true] %s19
      %s21 = sshll.u32 [#allocation2], 4
      %s22 = int_to_ptr.vmem [resolvable:$true] %s21
      %27 = dma.hbm_to_vmem [thread:$0]  %s20, 8704, %s22, [#allocation3], 128, 128, 8
    $region9: #{simple_net_forward.1} parent=1 // pred_fallthru
      _
    // Predicated region
    $region10: #{simple_net_forward.1} parent=1 // pred_check
      _
    $region11: #{simple_net_forward.1} parent=1 // pred_check_branch
      %29 = sbr.rel (0) target = $region13
    $region12: #{simple_net_forward.1} parent=1 // pred_region
      _
    $region13: #{simple_net_forward.1} parent=1 // pred_fallthru
      _
    // Predicated region
    $region14: #{simple_net_forward.1} parent=1 // pred_check
      _
    $region15: #{simple_net_forward.1} parent=1 // pred_check_branch
      %31 = sbr.rel (0) target = $region17
    $region16: #{simple_net_forward.1} parent=1 // pred_region
      _
    $region17: #{simple_net_forward.1} parent=1 // pred_fallthru
      _
    // Predicated region
    $region18: #{simple_net_forward.1} parent=1 // pred_check
      _
    $region19: #{simple_net_forward.1} parent=1 // pred_check_branch
      %33 = sbr.rel (0) target = $region21
    $region20: #{simple_net_forward.1} parent=1 // pred_region
      _
    $region21: #{simple_net_forward.1} parent=1 // pred_fallthru
      _
    // Predicated region
    $region22: #{simple_net_forward.1} parent=1 // pred_check
      _
    $region23: #{simple_net_forward.1} parent=1 // pred_check_branch
      %35 = sbr.rel (0) target = $region25
    $region24: #{simple_net_forward.1} parent=1 // pred_region
      _
    $region25: #{simple_net_forward.1} parent=1 // pred_fallthru
      _
    // Predicated region
    $region26: #{simple_net_forward.1} parent=1 // pred_check
      _
    $region27: #{simple_net_forward.1} parent=1 // pred_check_branch
      %37 = sbr.rel (0) target = $region29
    $region28: #{simple_net_forward.1} parent=1 // pred_region
      _
    $region29: #{simple_net_forward.1} parent=1 // pred_fallthru
      _
    // Predicated region
    $region30: #{simple_net_forward.1} parent=1 // pred_check
      _
    $region31: #{simple_net_forward.1} parent=1 // pred_check_branch
      %39 = sbr.rel (0) target = $region33
    $region32: #{simple_net_forward.1} parent=1 // pred_region
      %41 = dma.done [#allocation3], 8704
    $region33: #{simple_net_forward.1} parent=1 // pred_fallthru
      _
    %v43 = vld [vmem:[%s0] sm:$0xff]
    %v44 = vld [vmem:[%s0 + $0x8] sm:$0xff]
    %v45 = vld [vmem:[%s0 + $0x10] sm:$0xf]
    %v46 = vld [vmem:[%s0 + $0x14] sm:$0xff]
    %v47 = vld [vmem:[%s0 + $0x1c] sm:$0xff]
    %v48 = vld [vmem:[%s0 + $0x24] sm:$0xf]
    %v49 = vld [vmem:[#allocation2] sm:$0xff]
    %v50 = vld [vmem:[#allocation2 + $0x8] sm:$0xff]
    %v51 = vld [vmem:[#allocation2 + $0x10] sm:$0xff]
    %v52 = vld [vmem:[#allocation2 + $0x18] sm:$0xff]
    %v53 = vld [vmem:[#allocation2 + $0x20] sm:$0xff]
    %v54 = vld [vmem:[#allocation2 + $0x28] sm:$0xff]
    %v55 = vld [vmem:[#allocation2 + $0x30] sm:$0xff]
    %v56 = vld [vmem:[#allocation2 + $0x38] sm:$0xff]
    %v57 = vld [vmem:[#allocation2 + $0x40] sm:$0xff]
    %v58 = vld [vmem:[#allocation2 + $0x48] sm:$0xff]
    %v59 = vld [vmem:[#allocation2 + $0x50] sm:$0xff]
    %v60 = vld [vmem:[#allocation2 + $0x58] sm:$0xff]
    %v61 = vld [vmem:[#allocation2 + $0x60] sm:$0xff]
    %v62 = vld [vmem:[#allocation2 + $0x68] sm:$0xff]
    %v63 = vld [vmem:[#allocation2 + $0x70] sm:$0xff]
    %v64 = vld [vmem:[#allocation2 + $0x78] sm:$0xff]
    %v65 = vld [vmem:[#allocation2 + $0x80] sm:$0xff]
    %v66 = vld [vmem:[#allocation2 + $0x88] sm:$0xff]
    %v67 = vld [vmem:[#allocation2 + $0x90] sm:$0xff]
    %v68 = vld [vmem:[#allocation2 + $0x98] sm:$0xff]
    %v69 = vld [vmem:[#allocation2 + $0xa0] sm:$0xff]
    %v70 = vld [vmem:[#allocation2 + $0xa8] sm:$0xff]
    %v71 = vld [vmem:[#allocation2 + $0xb0] sm:$0xff]
    %v72 = vld [vmem:[#allocation2 + $0xb8] sm:$0xff]
    %v73 = vld [vmem:[#allocation2 + $0xc0] sm:$0xff]
    %v74 = vld [vmem:[#allocation2 + $0xc8] sm:$0xff]
    %v75 = vld [vmem:[#allocation2 + $0xd0] sm:$0xff]
    %v76 = vld [vmem:[#allocation2 + $0xd8] sm:$0xff]
    %v77 = vld [vmem:[#allocation2 + $0xe0] sm:$0xff]
    %v78 = vld [vmem:[#allocation2 + $0xe8] sm:$0xff]
    %v79 = vld [vmem:[#allocation2 + $0xf0] sm:$0xff]
    %v80 = vld [vmem:[#allocation2 + $0xf8] sm:$0xff]
    %v81 = vld [vmem:[#allocation2 + $0x100] sm:$0xff]
    %v82 = vld [vmem:[#allocation2 + $0x108] sm:$0xff]
    %v83 = vld [vmem:[#allocation2 + $0x110] sm:$0xff]
    %v84 = vld [vmem:[#allocation2 + $0x118] sm:$0xff]
    %v85 = vld [vmem:[#allocation2 + $0x120] sm:$0xff]
    %v86 = vld [vmem:[#allocation2 + $0x128] sm:$0xff]
    %v87 = vld [vmem:[#allocation2 + $0x130] sm:$0xff]
    %v88 = vld [vmem:[#allocation2 + $0x138] sm:$0xff]
    %v89 = vld [vmem:[#allocation2 + $0x140] sm:$0xff]
    %v90 = vld [vmem:[#allocation2 + $0x148] sm:$0xff]
    %v91 = vld [vmem:[#allocation2 + $0x150] sm:$0xff]
    %v92 = vld [vmem:[#allocation2 + $0x158] sm:$0xff]
    %v93 = vld [vmem:[#allocation2 + $0x160] sm:$0xff]
    %v94 = vld [vmem:[#allocation2 + $0x168] sm:$0xff]
    %v95 = vld [vmem:[#allocation2 + $0x170] sm:$0xff]
    %v96 = vld [vmem:[#allocation2 + $0x178] sm:$0xff]
    %v97 = vld [vmem:[#allocation2 + $0x180] sm:$0xff]
    %v98 = vld [vmem:[#allocation2 + $0x188] sm:$0xff]
    %v99 = vld [vmem:[#allocation2 + $0x190] sm:$0xff]
    %v100 = vld [vmem:[#allocation2 + $0x198] sm:$0xff]
    %v101 = vld [vmem:[#allocation2 + $0x1a0] sm:$0xff]
    %v102 = vld [vmem:[#allocation2 + $0x1a8] sm:$0xff]
    %v103 = vld [vmem:[#allocation2 + $0x1b0] sm:$0xff]
    %v104 = vld [vmem:[#allocation2 + $0x1b8] sm:$0xff]
    %v105 = vld [vmem:[#allocation2 + $0x1c0] sm:$0xff]
    %v106 = vld [vmem:[#allocation2 + $0x1c8] sm:$0xff]
    %v107 = vld [vmem:[#allocation2 + $0x1d0] sm:$0xff]
    %v108 = vld [vmem:[#allocation2 + $0x1d8] sm:$0xff]
    %v109 = vld [vmem:[#allocation2 + $0x1e0] sm:$0xff]
    %v110 = vld [vmem:[#allocation2 + $0x1e8] sm:$0xff]
    %v111 = vld [vmem:[#allocation2 + $0x1f0] sm:$0xff]
    %v112 = vld [vmem:[#allocation2 + $0x1f8] sm:$0xff]
    %v113 = vld [vmem:[#allocation2 + $0x200] sm:$0xff]
    %v114 = vld [vmem:[#allocation2 + $0x208] sm:$0xff]
    %v115 = vld [vmem:[#allocation2 + $0x210] sm:$0xff]
    %v116 = vld [vmem:[#allocation2 + $0x218] sm:$0xff]
    %v117 = vld [vmem:[%s2] sm:$0x3]
    %v119 = vperm.slane %v117, 0
    %v120 = vperm.slane %v117, 1
    %v129 = vunpack.c.l.b16 %v43
    %v130 = vunpack.c.h.b16 %v43
    %v131 = vunpack.c.l.b16 %v44
    %v132 = vunpack.c.h.b16 %v44
    %v133 = vunpack.c.l.b16 %v45
    %v134 = vunpack.c.l.b16 %v46
    %v135 = vunpack.c.h.b16 %v46
    %v136 = vunpack.c.l.b16 %v47
    %v137 = vunpack.c.h.b16 %v47
    %v138 = vunpack.c.l.b16 %v48
    %v139 = vpack.c.b16 %v134, %v129
    %v140 = vpack.c.b16 %v135, %v130
    %v141 = vpack.c.b16 %v136, %v131
    %v142 = vpack.c.b16 %v137, %v132
    %v143 = vpack.c.b16 %v138, %v133
    %v216 = vunpack.c.l.b16 %v49
    %v217 = vunpack.c.h.b16 %v49
    %v218 = vunpack.c.l.b16 %v50
    %v219 = vunpack.c.h.b16 %v50
    %v220 = vunpack.c.l.b16 %v51
    %v221 = vunpack.c.h.b16 %v51
    %v222 = vunpack.c.l.b16 %v52
    %v223 = vunpack.c.h.b16 %v52
    %v224 = vunpack.c.l.b16 %v53
    %v225 = vunpack.c.h.b16 %v53
    %v226 = vunpack.c.l.b16 %v54
    %v227 = vunpack.c.h.b16 %v54
    %v228 = vunpack.c.l.b16 %v55
    %v229 = vunpack.c.h.b16 %v55
    %v230 = vunpack.c.l.b16 %v56
    %v231 = vunpack.c.h.b16 %v56
    %v232 = vunpack.c.l.b16 %v57
    %v233 = vunpack.c.h.b16 %v57
    %v234 = vunpack.c.l.b16 %v58
    %v235 = vunpack.c.h.b16 %v58
    %v236 = vunpack.c.l.b16 %v59
    %v237 = vunpack.c.h.b16 %v59
    %v238 = vunpack.c.l.b16 %v60
    %v239 = vunpack.c.h.b16 %v60
    %v240 = vunpack.c.l.b16 %v61
    %v241 = vunpack.c.h.b16 %v61
    %v242 = vunpack.c.l.b16 %v62
    %v243 = vunpack.c.h.b16 %v62
    %v244 = vunpack.c.l.b16 %v63
    %v245 = vunpack.c.h.b16 %v63
    %v246 = vunpack.c.l.b16 %v64
    %v247 = vunpack.c.h.b16 %v64
    %v248 = vunpack.c.l.b16 %v65
    %v249 = vunpack.c.h.b16 %v65
    %v250 = vunpack.c.l.b16 %v66
    %v251 = vunpack.c.h.b16 %v66
    %v252 = vunpack.c.l.b16 %v67
    %v253 = vunpack.c.h.b16 %v67
    %v254 = vunpack.c.l.b16 %v68
    %v255 = vunpack.c.h.b16 %v68
    %v256 = vunpack.c.l.b16 %v69
    %v257 = vunpack.c.h.b16 %v69
    %v258 = vunpack.c.l.b16 %v70
    %v259 = vunpack.c.h.b16 %v70
    %v260 = vunpack.c.l.b16 %v71
    %v261 = vunpack.c.h.b16 %v71
    %v262 = vunpack.c.l.b16 %v72
    %v263 = vunpack.c.h.b16 %v72
    %v264 = vunpack.c.l.b16 %v73
    %v265 = vunpack.c.h.b16 %v73
    %v266 = vunpack.c.l.b16 %v74
    %v267 = vunpack.c.h.b16 %v74
    %v268 = vunpack.c.l.b16 %v75
    %v269 = vunpack.c.h.b16 %v75
    %v270 = vunpack.c.l.b16 %v76
    %v271 = vunpack.c.h.b16 %v76
    %v272 = vunpack.c.l.b16 %v77
    %v273 = vunpack.c.h.b16 %v77
    %v274 = vunpack.c.l.b16 %v78
    %v275 = vunpack.c.h.b16 %v78
    %v276 = vunpack.c.l.b16 %v79
    %v277 = vunpack.c.h.b16 %v79
    %v278 = vunpack.c.l.b16 %v80
    %v279 = vunpack.c.h.b16 %v80
    %v280 = vunpack.c.l.b16 %v81
    %v281 = vunpack.c.h.b16 %v81
    %v282 = vunpack.c.l.b16 %v82
    %v283 = vunpack.c.h.b16 %v82
    %v284 = vunpack.c.l.b16 %v83
    %v285 = vunpack.c.h.b16 %v83
    %v286 = vunpack.c.l.b16 %v84
    %v287 = vunpack.c.h.b16 %v84
    %v288 = vunpack.c.l.b16 %v85
    %v289 = vunpack.c.h.b16 %v85
    %v290 = vunpack.c.l.b16 %v86
    %v291 = vunpack.c.h.b16 %v86
    %v292 = vunpack.c.l.b16 %v87
    %v293 = vunpack.c.h.b16 %v87
    %v294 = vunpack.c.l.b16 %v88
    %v295 = vunpack.c.h.b16 %v88
    %v296 = vunpack.c.l.b16 %v89
    %v297 = vunpack.c.h.b16 %v89
    %v298 = vunpack.c.l.b16 %v90
    %v299 = vunpack.c.h.b16 %v90
    %v300 = vunpack.c.l.b16 %v91
    %v301 = vunpack.c.h.b16 %v91
    %v302 = vunpack.c.l.b16 %v92
    %v303 = vunpack.c.h.b16 %v92
    %v304 = vunpack.c.l.b16 %v93
    %v305 = vunpack.c.h.b16 %v93
    %v306 = vunpack.c.l.b16 %v94
    %v307 = vunpack.c.h.b16 %v94
    %v308 = vunpack.c.l.b16 %v95
    %v309 = vunpack.c.h.b16 %v95
    %v310 = vunpack.c.l.b16 %v96
    %v311 = vunpack.c.h.b16 %v96
    %v312 = vunpack.c.l.b16 %v97
    %v313 = vunpack.c.h.b16 %v97
    %v314 = vunpack.c.l.b16 %v98
    %v315 = vunpack.c.h.b16 %v98
    %v316 = vunpack.c.l.b16 %v99
    %v317 = vunpack.c.h.b16 %v99
    %v318 = vunpack.c.l.b16 %v100
    %v319 = vunpack.c.h.b16 %v100
    %v320 = vunpack.c.l.b16 %v101
    %v321 = vunpack.c.h.b16 %v101
    %v322 = vunpack.c.l.b16 %v102
    %v323 = vunpack.c.h.b16 %v102
    %v324 = vunpack.c.l.b16 %v103
    %v325 = vunpack.c.h.b16 %v103
    %v326 = vunpack.c.l.b16 %v104
    %v327 = vunpack.c.h.b16 %v104
    %v328 = vunpack.c.l.b16 %v105
    %v329 = vunpack.c.h.b16 %v105
    %v330 = vunpack.c.l.b16 %v106
    %v331 = vunpack.c.h.b16 %v106
    %v332 = vunpack.c.l.b16 %v107
    %v333 = vunpack.c.h.b16 %v107
    %v334 = vunpack.c.l.b16 %v108
    %v335 = vunpack.c.h.b16 %v108
    %v336 = vunpack.c.l.b16 %v109
    %v337 = vunpack.c.h.b16 %v109
    %v338 = vunpack.c.l.b16 %v110
    %v339 = vunpack.c.h.b16 %v110
    %v340 = vunpack.c.l.b16 %v111
    %v341 = vunpack.c.h.b16 %v111
    %v342 = vunpack.c.l.b16 %v112
    %v343 = vunpack.c.h.b16 %v112
    %v344 = vunpack.c.l.b16 %v113
    %v345 = vunpack.c.h.b16 %v113
    %v346 = vunpack.c.l.b16 %v114
    %v347 = vunpack.c.h.b16 %v114
    %v348 = vunpack.c.l.b16 %v115
    %v349 = vunpack.c.h.b16 %v115
    %v350 = vunpack.c.l.b16 %v116
    %v351 = vunpack.c.h.b16 %v116
    %v352 = vpack.c.b16 %v218, %v216
    %v353 = vpack.c.b16 %v219, %v217
    %v354 = vpack.c.b16 %v222, %v220
    %v355 = vpack.c.b16 %v223, %v221
    %v356 = vpack.c.b16 %v226, %v224
    %v357 = vpack.c.b16 %v227, %v225
    %v358 = vpack.c.b16 %v230, %v228
    %v359 = vpack.c.b16 %v231, %v229
    %v360 = vpack.c.b16 %v234, %v232
    %v361 = vpack.c.b16 %v235, %v233
    %v362 = vpack.c.b16 %v238, %v236
    %v363 = vpack.c.b16 %v239, %v237
    %v364 = vpack.c.b16 %v242, %v240
    %v365 = vpack.c.b16 %v243, %v241
    %v366 = vpack.c.b16 %v246, %v244
    %v367 = vpack.c.b16 %v247, %v245
    %v368 = vpack.c.b16 %v250, %v248
    %v369 = vpack.c.b16 %v251, %v249
    %v370 = vpack.c.b16 %v254, %v252
    %v371 = vpack.c.b16 %v255, %v253
    %v372 = vpack.c.b16 %v258, %v256
    %v373 = vpack.c.b16 %v259, %v257
    %v374 = vpack.c.b16 %v262, %v260
    %v375 = vpack.c.b16 %v263, %v261
    %v376 = vpack.c.b16 %v266, %v264
    %v377 = vpack.c.b16 %v267, %v265
    %v378 = vpack.c.b16 %v270, %v268
    %v379 = vpack.c.b16 %v271, %v269
    %v380 = vpack.c.b16 %v274, %v272
    %v381 = vpack.c.b16 %v275, %v273
    %v382 = vpack.c.b16 %v278, %v276
    %v383 = vpack.c.b16 %v279, %v277
    %v384 = vpack.c.b16 %v282, %v280
    %v385 = vpack.c.b16 %v283, %v281
    %v386 = vpack.c.b16 %v286, %v284
    %v387 = vpack.c.b16 %v287, %v285
    %v388 = vpack.c.b16 %v290, %v288
    %v389 = vpack.c.b16 %v291, %v289
    %v390 = vpack.c.b16 %v294, %v292
    %v391 = vpack.c.b16 %v295, %v293
    %v392 = vpack.c.b16 %v298, %v296
    %v393 = vpack.c.b16 %v299, %v297
    %v394 = vpack.c.b16 %v302, %v300
    %v395 = vpack.c.b16 %v303, %v301
    %v396 = vpack.c.b16 %v306, %v304
    %v397 = vpack.c.b16 %v307, %v305
    %v398 = vpack.c.b16 %v310, %v308
    %v399 = vpack.c.b16 %v311, %v309
    %v400 = vpack.c.b16 %v314, %v312
    %v401 = vpack.c.b16 %v315, %v313
    %v402 = vpack.c.b16 %v318, %v316
    %v403 = vpack.c.b16 %v319, %v317
    %v404 = vpack.c.b16 %v322, %v320
    %v405 = vpack.c.b16 %v323, %v321
    %v406 = vpack.c.b16 %v326, %v324
    %v407 = vpack.c.b16 %v327, %v325
    %v408 = vpack.c.b16 %v330, %v328
    %v409 = vpack.c.b16 %v331, %v329
    %v410 = vpack.c.b16 %v334, %v332
    %v411 = vpack.c.b16 %v335, %v333
    %v412 = vpack.c.b16 %v338, %v336
    %v413 = vpack.c.b16 %v339, %v337
    %v414 = vpack.c.b16 %v342, %v340
    %v415 = vpack.c.b16 %v343, %v341
    %v416 = vpack.c.b16 %v346, %v344
    %v417 = vpack.c.b16 %v347, %v345
    %v418 = vpack.c.b16 %v350, %v348
    %v419 = vpack.c.b16 %v351, %v349
    %vm488 = vcmask 261120
    %v490 = vsel %vm488, %v143, 0
    %492 = vmatpush.bf16.msra.mxu0 %v366
    %493 = vmatpush.bf16.msra.mxu0 %v364
    %494 = vmatpush.bf16.msra.mxu0 %v362
    %495 = vmatpush.bf16.msra.mxu0 %v360
    %496 = vmatpush.bf16.msra.mxu0 %v358
    %497 = vmatpush.bf16.msra.mxu0 %v356
    %498 = vmatpush.bf16.msra.mxu0 %v354
    %499 = vmatpush.bf16.msra.mxu0 %v352
    %500 = vmatmul.bf16.gmra.mxu0 %v139
    %v501 = vpop.f32.mrf.mxu0
    %v502 = vadd.f32 %v119, %v501
    %v503 = vpop.f32.mrf.mxu0
    %v504 = vadd.f32 %v119, %v503
    %505 = vdwg.mxu0
    %506 = vmatpush.bf16.msra.mxu0 %v382
    %507 = vmatpush.bf16.msra.mxu0 %v380
    %508 = vmatpush.bf16.msra.mxu0 %v378
    %509 = vmatpush.bf16.msra.mxu0 %v376
    %510 = vmatpush.bf16.msra.mxu0 %v374
    %511 = vmatpush.bf16.msra.mxu0 %v372
    %512 = vmatpush.bf16.msra.mxu0 %v370
    %513 = vmatpush.bf16.msra.mxu0 %v368
    %514 = vmatmul.bf16.gmra.mxu0 %v140
    %v515 = vpop.f32.mrf.mxu0
    %v516 = vadd.f32 %v502, %v515
    %v517 = vpop.f32.mrf.mxu0
    %v518 = vadd.f32 %v504, %v517
    %519 = vdwg.mxu0
    %520 = vmatpush.bf16.msra.mxu0 %v398
    %521 = vmatpush.bf16.msra.mxu0 %v396
    %522 = vmatpush.bf16.msra.mxu0 %v394
    %523 = vmatpush.bf16.msra.mxu0 %v392
    %524 = vmatpush.bf16.msra.mxu0 %v390
    %525 = vmatpush.bf16.msra.mxu0 %v388
    %526 = vmatpush.bf16.msra.mxu0 %v386
    %527 = vmatpush.bf16.msra.mxu0 %v384
    %528 = vmatmul.bf16.gmra.mxu0 %v141
    %v529 = vpop.f32.mrf.mxu0
    %v530 = vadd.f32 %v516, %v529
    %v531 = vpop.f32.mrf.mxu0
    %v532 = vadd.f32 %v518, %v531
    %533 = vdwg.mxu0
    %534 = vmatpush.bf16.msra.mxu0 %v414
    %535 = vmatpush.bf16.msra.mxu0 %v412
    %536 = vmatpush.bf16.msra.mxu0 %v410
    %537 = vmatpush.bf16.msra.mxu0 %v408
    %538 = vmatpush.bf16.msra.mxu0 %v406
    %539 = vmatpush.bf16.msra.mxu0 %v404
    %540 = vmatpush.bf16.msra.mxu0 %v402
    %541 = vmatpush.bf16.msra.mxu0 %v400
    %542 = vmatmul.bf16.gmra.mxu0 %v142
    %v543 = vpop.f32.mrf.mxu0
    %v544 = vadd.f32 %v530, %v543
    %v545 = vpop.f32.mrf.mxu0
    %v546 = vadd.f32 %v532, %v545
    %547 = vdwg.mxu0
    %548 = vmatpush.bf16.msra.mxu0 0
    %549 = vmatpush.bf16.msra.mxu0 0
    %550 = vmatpush.bf16.msra.mxu0 0
    %551 = vmatpush.bf16.msra.mxu0 0
    %552 = vmatpush.bf16.msra.mxu0 0
    %553 = vmatpush.bf16.msra.mxu0 0
    %554 = vmatpush.bf16.msra.mxu0 %v418
    %555 = vmatpush.bf16.msra.mxu0 %v416
    %556 = vmatmul.bf16.gmra.mxu0 %v490
    %v557 = vpop.f32.mrf.mxu0
    %v558 = vadd.f32 %v544, %v557
    %v559 = vpop.f32.mrf.mxu0
    %v560 = vadd.f32 %v546, %v559
    %561 = vdwg.mxu0
    %562 = vmatpush.bf16.msra.mxu0 %v367
    %563 = vmatpush.bf16.msra.mxu0 %v365
    %564 = vmatpush.bf16.msra.mxu0 %v363
    %565 = vmatpush.bf16.msra.mxu0 %v361
    %566 = vmatpush.bf16.msra.mxu0 %v359
    %567 = vmatpush.bf16.msra.mxu0 %v357
    %568 = vmatpush.bf16.msra.mxu0 %v355
    %569 = vmatpush.bf16.msra.mxu0 %v353
    %570 = vmatmul.bf16.gmra.mxu0 %v139
    %v571 = vpop.f32.mrf.mxu0
    %v572 = vadd.f32 %v120, %v571
    %v573 = vpop.f32.mrf.mxu0
    %v574 = vadd.f32 %v120, %v573
    %575 = vdwg.mxu0
    %576 = vmatpush.bf16.msra.mxu0 %v383
    %577 = vmatpush.bf16.msra.mxu0 %v381
    %578 = vmatpush.bf16.msra.mxu0 %v379
    %579 = vmatpush.bf16.msra.mxu0 %v377
    %580 = vmatpush.bf16.msra.mxu0 %v375
    %581 = vmatpush.bf16.msra.mxu0 %v373
    %582 = vmatpush.bf16.msra.mxu0 %v371
    %583 = vmatpush.bf16.msra.mxu0 %v369
    %584 = vmatmul.bf16.gmra.mxu0 %v140
    %v585 = vpop.f32.mrf.mxu0
    %v586 = vadd.f32 %v572, %v585
    %v587 = vpop.f32.mrf.mxu0
    %v588 = vadd.f32 %v574, %v587
    %589 = vdwg.mxu0
    %590 = vmatpush.bf16.msra.mxu0 %v399
    %591 = vmatpush.bf16.msra.mxu0 %v397
    %592 = vmatpush.bf16.msra.mxu0 %v395
    %593 = vmatpush.bf16.msra.mxu0 %v393
    %594 = vmatpush.bf16.msra.mxu0 %v391
    %595 = vmatpush.bf16.msra.mxu0 %v389
    %596 = vmatpush.bf16.msra.mxu0 %v387
    %597 = vmatpush.bf16.msra.mxu0 %v385
    %598 = vmatmul.bf16.gmra.mxu0 %v141
    %v599 = vpop.f32.mrf.mxu0
    %v600 = vadd.f32 %v586, %v599
    %v601 = vpop.f32.mrf.mxu0
    %v602 = vadd.f32 %v588, %v601
    %603 = vdwg.mxu0
    %604 = vmatpush.bf16.msra.mxu0 %v415
    %605 = vmatpush.bf16.msra.mxu0 %v413
    %606 = vmatpush.bf16.msra.mxu0 %v411
    %607 = vmatpush.bf16.msra.mxu0 %v409
    %608 = vmatpush.bf16.msra.mxu0 %v407
    %609 = vmatpush.bf16.msra.mxu0 %v405
    %610 = vmatpush.bf16.msra.mxu0 %v403
    %611 = vmatpush.bf16.msra.mxu0 %v401
    %612 = vmatmul.bf16.gmra.mxu0 %v142
    %v613 = vpop.f32.mrf.mxu0
    %v614 = vadd.f32 %v600, %v613
    %v615 = vpop.f32.mrf.mxu0
    %v616 = vadd.f32 %v602, %v615
    %617 = vdwg.mxu0
    %618 = vmatpush.bf16.msra.mxu0 0
    %619 = vmatpush.bf16.msra.mxu0 0
    %620 = vmatpush.bf16.msra.mxu0 0
    %621 = vmatpush.bf16.msra.mxu0 0
    %622 = vmatpush.bf16.msra.mxu0 0
    %623 = vmatpush.bf16.msra.mxu0 0
    %624 = vmatpush.bf16.msra.mxu0 %v419
    %625 = vmatpush.bf16.msra.mxu0 %v417
    %626 = vmatmul.bf16.gmra.mxu0 %v490
    %v627 = vpop.f32.mrf.mxu0
    %v628 = vadd.f32 %v614, %v627
    %v629 = vpop.f32.mrf.mxu0
    %v630 = vadd.f32 %v616, %v629
    %631 = vdwg.mxu0
    %v632 = vmax.f32 %v558, 0.0
    %v633 = vmax.f32 %v628, 0.0
    %v634 = vmax.f32 %v560, 0.0
    %v635 = vmax.f32 %v630, 0.0
    %v636 = vpack.c.bf16 %v634, %v632
    %v637 = vpack.c.bf16 %v635, %v633
    %v638 = vld [vmem:[%s3] sm:$0xf]
    %v639 = vld [vmem:[%s3 + $0x4] sm:$0xf]
    %v640 = vld [vmem:[%s3 + $0x8] sm:$0xf]
    %v641 = vld [vmem:[%s3 + $0xc] sm:$0xf]
    %v642 = vld [vmem:[%s3 + $0x10] sm:$0xf]
    %v643 = vld [vmem:[%s3 + $0x14] sm:$0xf]
    %v644 = vld [vmem:[%s3 + $0x18] sm:$0xf]
    %v645 = vld [vmem:[%s3 + $0x1c] sm:$0xf]
    %v646 = vld [vmem:[%s3 + $0x20] sm:$0xf]
    %v647 = vld [vmem:[%s3 + $0x24] sm:$0xf]
    %v648 = vld [vmem:[%s3 + $0x28] sm:$0xf]
    %v649 = vld [vmem:[%s3 + $0x2c] sm:$0xf]
    %v650 = vld [vmem:[%s3 + $0x30] sm:$0xf]
    %v651 = vld [vmem:[%s3 + $0x34] sm:$0xf]
    %v652 = vld [vmem:[%s3 + $0x38] sm:$0xf]
    %v653 = vld [vmem:[%s3 + $0x3c] sm:$0xf]
    %v654 = vld [vmem:[%s3 + $0x40] sm:$0xf]
    %v655 = vld [vmem:[%s3 + $0x44] sm:$0xf]
    %v656 = vld [vmem:[%s3 + $0x48] sm:$0xf]
    %v657 = vld [vmem:[%s3 + $0x4c] sm:$0xf]
    %v658 = vld [vmem:[%s3 + $0x50] sm:$0xf]
    %v659 = vld [vmem:[%s3 + $0x54] sm:$0xf]
    %v660 = vld [vmem:[%s3 + $0x58] sm:$0xf]
    %v661 = vld [vmem:[%s3 + $0x5c] sm:$0xf]
    %v662 = vld [vmem:[%s3 + $0x60] sm:$0xf]
    %v663 = vld [vmem:[%s3 + $0x64] sm:$0xf]
    %v664 = vld [vmem:[%s3 + $0x68] sm:$0xf]
    %v665 = vld [vmem:[%s3 + $0x6c] sm:$0xf]
    %v666 = vld [vmem:[%s3 + $0x70] sm:$0xf]
    %v667 = vld [vmem:[%s3 + $0x74] sm:$0xf]
    %v668 = vld [vmem:[%s3 + $0x78] sm:$0xf]
    %v669 = vld [vmem:[%s3 + $0x7c] sm:$0xf]
    %v670 = vld [vmem:[%s4] sm:$0x1]
    %v672 = vperm.slane %v670, 0
    %v706 = vunpack.c.l.b16 %v638
    %v707 = vunpack.c.l.b16 %v639
    %v708 = vunpack.c.l.b16 %v640
    %v709 = vunpack.c.l.b16 %v641
    %v710 = vunpack.c.l.b16 %v642
    %v711 = vunpack.c.l.b16 %v643
    %v712 = vunpack.c.l.b16 %v644
    %v713 = vunpack.c.l.b16 %v645
    %v714 = vunpack.c.l.b16 %v646
    %v715 = vunpack.c.l.b16 %v647
    %v716 = vunpack.c.l.b16 %v648
    %v717 = vunpack.c.l.b16 %v649
    %v718 = vunpack.c.l.b16 %v650
    %v719 = vunpack.c.l.b16 %v651
    %v720 = vunpack.c.l.b16 %v652
    %v721 = vunpack.c.l.b16 %v653
    %v722 = vunpack.c.l.b16 %v654
    %v723 = vunpack.c.l.b16 %v655
    %v724 = vunpack.c.l.b16 %v656
    %v725 = vunpack.c.l.b16 %v657
    %v726 = vunpack.c.l.b16 %v658
    %v727 = vunpack.c.l.b16 %v659
    %v728 = vunpack.c.l.b16 %v660
    %v729 = vunpack.c.l.b16 %v661
    %v730 = vunpack.c.l.b16 %v662
    %v731 = vunpack.c.l.b16 %v663
    %v732 = vunpack.c.l.b16 %v664
    %v733 = vunpack.c.l.b16 %v665
    %v734 = vunpack.c.l.b16 %v666
    %v735 = vunpack.c.l.b16 %v667
    %v736 = vunpack.c.l.b16 %v668
    %v737 = vunpack.c.l.b16 %v669
    %v738 = vpack.c.b16 %v707, %v706
    %v739 = vpack.c.b16 %v709, %v708
    %v740 = vpack.c.b16 %v711, %v710
    %v741 = vpack.c.b16 %v713, %v712
    %v742 = vpack.c.b16 %v715, %v714
    %v743 = vpack.c.b16 %v717, %v716
    %v744 = vpack.c.b16 %v719, %v718
    %v745 = vpack.c.b16 %v721, %v720
    %v746 = vpack.c.b16 %v723, %v722
    %v747 = vpack.c.b16 %v725, %v724
    %v748 = vpack.c.b16 %v727, %v726
    %v749 = vpack.c.b16 %v729, %v728
    %v750 = vpack.c.b16 %v731, %v730
    %v751 = vpack.c.b16 %v733, %v732
    %v752 = vpack.c.b16 %v735, %v734
    %v753 = vpack.c.b16 %v737, %v736
    %770 = vmatpush.bf16.msra.mxu0 %v745
    %771 = vmatpush.bf16.msra.mxu0 %v744
    %772 = vmatpush.bf16.msra.mxu0 %v743
    %773 = vmatpush.bf16.msra.mxu0 %v742
    %774 = vmatpush.bf16.msra.mxu0 %v741
    %775 = vmatpush.bf16.msra.mxu0 %v740
    %776 = vmatpush.bf16.msra.mxu0 %v739
    %777 = vmatpush.bf16.msra.mxu0 %v738
    %778 = vmatmul.bf16.gmra.mxu0 %v636
    %v779 = vpop.f32.mrf.mxu0
    %v780 = vadd.f32 %v672, %v779
    %v781 = vpop.f32.mrf.mxu0
    %v782 = vadd.f32 %v672, %v781
    %783 = vdwg.mxu0
    %784 = vmatpush.bf16.msra.mxu0 %v753
    %785 = vmatpush.bf16.msra.mxu0 %v752
    %786 = vmatpush.bf16.msra.mxu0 %v751
    %787 = vmatpush.bf16.msra.mxu0 %v750
    %788 = vmatpush.bf16.msra.mxu0 %v749
    %789 = vmatpush.bf16.msra.mxu0 %v748
    %790 = vmatpush.bf16.msra.mxu0 %v747
    %791 = vmatpush.bf16.msra.mxu0 %v746
    %792 = vmatmul.bf16.gmra.mxu0 %v637
    %v793 = vpop.f32.mrf.mxu0
    %v794 = vadd.f32 %v780, %v793
    %v795 = vpop.f32.mrf.mxu0
    %v796 = vadd.f32 %v782, %v795
    %797 = vdwg.mxu0
    %v798 = vmax.f32 %v794, 0.0
    %v799 = vmax.f32 %v796, 0.0
    %v800 = vpack.c.bf16 %v799, %v798
    %v801 = vld [vmem:[%s5] sm:$0xf]
    %v802 = vld [vmem:[%s5 + $0x4] sm:$0xf]
    %v803 = vld [vmem:[%s5 + $0x8] sm:$0xf]
    %v804 = vld [vmem:[%s5 + $0xc] sm:$0xf]
    %v805 = vld [vmem:[%s5 + $0x10] sm:$0xf]
    %v806 = vld [vmem:[%s5 + $0x14] sm:$0xf]
    %v807 = vld [vmem:[%s5 + $0x18] sm:$0xf]
    %v808 = vld [vmem:[%s5 + $0x1c] sm:$0xf]
    %v809 = vld [vmem:[%s5 + $0x20] sm:$0xf]
    %v810 = vld [vmem:[%s5 + $0x24] sm:$0xf]
    %v811 = vld [vmem:[%s5 + $0x28] sm:$0xf]
    %v812 = vld [vmem:[%s5 + $0x2c] sm:$0xf]
    %v813 = vld [vmem:[%s5 + $0x30] sm:$0xf]
    %v814 = vld [vmem:[%s5 + $0x34] sm:$0xf]
    %v815 = vld [vmem:[%s5 + $0x38] sm:$0xf]
    %v816 = vld [vmem:[%s5 + $0x3c] sm:$0xf]
    %v817 = vld [vmem:[%s6] sm:$0x1]
    %v819 = vperm.slane %v817, 0
    %v837 = vunpack.c.l.b16 %v801
    %v838 = vunpack.c.l.b16 %v802
    %v839 = vunpack.c.l.b16 %v803
    %v840 = vunpack.c.l.b16 %v804
    %v841 = vunpack.c.l.b16 %v805
    %v842 = vunpack.c.l.b16 %v806
    %v843 = vunpack.c.l.b16 %v807
    %v844 = vunpack.c.l.b16 %v808
    %v845 = vunpack.c.l.b16 %v809
    %v846 = vunpack.c.l.b16 %v810
    %v847 = vunpack.c.l.b16 %v811
    %v848 = vunpack.c.l.b16 %v812
    %v849 = vunpack.c.l.b16 %v813
    %v850 = vunpack.c.l.b16 %v814
    %v851 = vunpack.c.l.b16 %v815
    %v852 = vunpack.c.l.b16 %v816
    %v853 = vpack.c.b16 %v838, %v837
    %v854 = vpack.c.b16 %v840, %v839
    %v855 = vpack.c.b16 %v842, %v841
    %v856 = vpack.c.b16 %v844, %v843
    %v857 = vpack.c.b16 %v846, %v845
    %v858 = vpack.c.b16 %v848, %v847
    %v859 = vpack.c.b16 %v850, %v849
    %v860 = vpack.c.b16 %v852, %v851
    %869 = vmatpush.bf16.msra.mxu0 %v860
    %870 = vmatpush.bf16.msra.mxu0 %v859
    %871 = vmatpush.bf16.msra.mxu0 %v858
    %872 = vmatpush.bf16.msra.mxu0 %v857
    %873 = vmatpush.bf16.msra.mxu0 %v856
    %874 = vmatpush.bf16.msra.mxu0 %v855
    %875 = vmatpush.bf16.msra.mxu0 %v854
    %876 = vmatpush.bf16.msra.mxu0 %v853
    %877 = vmatmul.bf16.gmra.mxu0 %v800
    %v878 = vpop.f32.mrf.mxu0
    %v879 = vadd.f32 %v819, %v878
    %v880 = vpop.f32.mrf.mxu0
    %v881 = vadd.f32 %v819, %v880
    %882 = vdwg.mxu0
    %v883 = vpack.c.bf16 %v879, %v879
    %v884 = vpack.c.bf16 %v881, %v881
    %885 = vst [vmem:[%s7] sm:$0xf] %v883
    %886 = vst [vmem:[%s7 + $0x4] sm:$0xf] %v884
    // Predicated region
    $region34: #{simple_net_forward.1} parent=1 // pred_check
      _
    $region35: #{simple_net_forward.1} parent=1 // pred_check_branch
      %888 = sbr.rel (0) target = $region37
    $region36: #{simple_net_forward.1} parent=1 // pred_region
      _
    $region37: #{simple_net_forward.1} parent=1 // pred_fallthru
      _
    // Predicated region
    $region38: #{simple_net_forward.1} parent=1 // pred_check
      _
    $region39: #{simple_net_forward.1} parent=1 // pred_check_branch
      %890 = sbr.rel (0) target = $region41
    $region40: #{simple_net_forward.1} parent=1 // pred_region
      _
    $region41: #{simple_net_forward.1} parent=1 // pred_fallthru
      _
    %891 = vsyncpa [#allocation3], 1

</llo_original>
